<compile_context>
chip_gen: v5e
topology: v5e:2x2
jax: 0.10.0
libtpu: 0.0.40
codegen_flags: <defaults>
</compile_context>

<pallas_src>
import math

import jax
import jax.numpy as jnp
from jax.experimental import pallas as pl
from jax.experimental.pallas import tpu as pltpu


_LANE = 128          # TPU lane width
_FUSED_K_MAX = 1024  # collapse the K axis into the block when in_features <= this


# --------------------------------------------------------------------------
# Kernels
# --------------------------------------------------------------------------
def _sine_fused_kernel(x_ref, wt_ref, b_ref, o_ref):
    """Grid = (M//tm, N//tn); full K resident in the block.

    omega_0 is pre-folded into wt/b, so this is just dot -> +bias -> sin.
    """
    z = jnp.dot(x_ref[...], wt_ref[...], preferred_element_type=jnp.float32)
    o_ref[...] = jnp.sin(z + b_ref[...]).astype(o_ref.dtype)


def _sine_tiled_kernel(x_ref, wt_ref, b_ref, o_ref, acc_ref):
    """Fallback for very large K. Grid = (M//tm, N//tn, K//tk); K last ('arbitrary')."""
    k = pl.program_id(2)

    @pl.when(k == 0)
    def _():
        acc_ref[...] = jnp.zeros_like(acc_ref)

    acc_ref[...] += jnp.dot(
        x_ref[...], wt_ref[...], preferred_element_type=jnp.float32
    )

    @pl.when(k == pl.num_programs(2) - 1)
    def _():
        o_ref[...] = jnp.sin(acc_ref[...] + b_ref[...]).astype(o_ref.dtype)


# --------------------------------------------------------------------------
# Parameter preparation (one-time; hoisted out of the per-call path)
# --------------------------------------------------------------------------
def prepare_sine_layer_params(weight, bias, omega_0, *, compute_dtype=jnp.bfloat16):
    """Fold omega_0 into W and b, transpose W to (K, N), pad N to a lane multiple.

    Returns (wt, bp, out_features):
      wt: (K, Np) in `compute_dtype`   (Np = ceil(N/128)*128)
      bp: (1, Np) float32 bias row
    """
    out_features, in_features = weight.shape
    np_pad = pl.cdiv(out_features, _LANE) * _LANE

    wt = (float(omega_0) * weight.astype(jnp.float32)).T          # (K, N)
    wt = jnp.pad(wt, ((0, 0), (0, np_pad - out_features))).astype(compute_dtype)

    b = float(omega_0) * bias.astype(jnp.float32)
    bp = jnp.pad(b, (0, np_pad - out_features)).reshape(1, np_pad)  # keep f32
    return wt, bp, out_features


# --------------------------------------------------------------------------
# Forward
# --------------------------------------------------------------------------
def sine_layer_forward_prepared(x, wt, bp, out_features, *, tm=512, tn=256, tk=256):
    """x: (..., in_features); wt: (K, Np); bp: (1, Np) -- from prepare_sine_layer_params."""
    *lead, in_features = x.shape
    K, Np = wt.shape
    assert in_features == K, (in_features, K)

    x2 = x.reshape(-1, K).astype(wt.dtype)
    M = x2.shape[0]

    # Row tiling: shrink tm for small problems; pad M to a tile multiple.
    tm_eff = min(tm, pl.cdiv(M, 8) * 8)
    Mp = pl.cdiv(M, tm_eff) * tm_eff
    if Mp != M:
        x2 = jnp.pad(x2, ((0, Mp - M), (0, 0)))

    # Output tiling: Np is a multiple of 128; pick the largest of {tn, 128} dividing it.
    tn_eff = tn if Np % tn == 0 else math.gcd(Np, tn)

    itemsize = jnp.dtype(wt.dtype).itemsize
    cost = pl.CostEstimate(
        flops=2 * Mp * K * Np,
        transcendentals=Mp * Np,
        bytes_accessed=Mp * K * itemsize + K * Np * itemsize + Mp * Np * 4 + Np * 4,
    )

    if K <= _FUSED_K_MAX:
        # Fused path: 2-D grid, no accumulator scratch, no K-padding needed
        # (full-K block equals the array dim, which satisfies the tiling rule).
        out = pl.pallas_call(
            _sine_fused_kernel,
            out_shape=jax.ShapeDtypeStruct((Mp, Np), jnp.float32),
            grid_spec=pltpu.PrefetchScalarGridSpec(
                num_scalar_prefetch=0,
                grid=(Mp // tm_eff, Np // tn_eff),
                in_specs=[
                    pl.BlockSpec((tm_eff, K), lambda i, j: (i, 0)),      # x rows
                    pl.BlockSpec((K, tn_eff), lambda i, j: (0, j)),      # omega*W^T
                    pl.BlockSpec((1, tn_eff), lambda i, j: (0, j)),      # omega*b
                ],
                out_specs=pl.BlockSpec((tm_eff, tn_eff), lambda i, j: (i, j)),
            ),
            compiler_params=pltpu.CompilerParams(
                dimension_semantics=("parallel", "parallel")
            ),
            cost_estimate=cost,
        )(x2, wt, bp)
    else:
        # Large-K fallback: accumulate over a K grid axis (pad K to tk multiple).
        Kp = pl.cdiv(K, tk) * tk
        if Kp != K:
            x2 = jnp.pad(x2, ((0, 0), (0, Kp - K)))
            wt = jnp.pad(wt, ((0, Kp - K), (0, 0)))
        out = pl.pallas_call(
            _sine_tiled_kernel,
            out_shape=jax.ShapeDtypeStruct((Mp, Np), jnp.float32),
            grid_spec=pltpu.PrefetchScalarGridSpec(
                num_scalar_prefetch=0,
                grid=(Mp // tm_eff, Np // tn_eff, Kp // tk),
                in_specs=[
                    pl.BlockSpec((tm_eff, tk), lambda i, j, k: (i, k)),
                    pl.BlockSpec((tk, tn_eff), lambda i, j, k: (k, j)),
                    pl.BlockSpec((1, tn_eff), lambda i, j, k: (0, j)),
                ],
                out_specs=pl.BlockSpec((tm_eff, tn_eff), lambda i, j, k: (i, j)),
                scratch_shapes=[pltpu.VMEM((tm_eff, tn_eff), jnp.float32)],
            ),
            compiler_params=pltpu.CompilerParams(
                dimension_semantics=("parallel", "parallel", "arbitrary")
            ),
            cost_estimate=cost,
        )(x2, wt, bp)

    return out[:M, :out_features].reshape(*lead, out_features)


def sine_layer_forward(x, weight, bias, omega_0, *, compute_dtype=jnp.bfloat16,
                       tm=512, tn=256, tk=256):
    """Convenience wrapper (prepares params per call; prefer the prepared API)."""
    wt, bp, n_out = prepare_sine_layer_params(
        weight, bias, omega_0, compute_dtype=compute_dtype
    )
    return sine_layer_forward_prepared(x, wt, bp, n_out, tm=tm, tn=tn, tk=tk)


# --------------------------------------------------------------------------
# Init matching SineLayer.__init__
# --------------------------------------------------------------------------
def init_sine_layer_params(key, in_features, out_features, *, is_first, omega_0):
    kw, kb = jax.random.split(key)
    if is_first:
        bound = 1.0 / in_features
    else:
        bound = math.sqrt(6.0 / in_features) / omega_0
    weight = jax.random.uniform(
        kw, (out_features, in_features), jnp.float32, -bound, bound
    )
    # nn.Linear default bias init: U(-1/sqrt(in), 1/sqrt(in))
    b_bound = 1.0 / math.sqrt(in_features)
    bias = jax.random.uniform(kb, (out_features,), jnp.float32, -b_bound, b_bound)
    return weight, bias


if __name__ == "__main__":
    key = jax.random.PRNGKey(0)
    k_x, k_p = jax.random.split(key)

    batch, n_points, in_features, out_features = 2, 8, 32, 64
    omega_0 = 30.0

    x = jax.random.normal(k_x, (batch, n_points, in_features), jnp.float32)
    weight, bias = init_sine_layer_params(
        k_p, in_features, out_features, is_first=True, omega_0=omega_0
    )

    # ---- f32-operand path: tight check against the plain-JAX reference ----
    wt32, bp32, n_out = prepare_sine_layer_params(
        weight, bias, omega_0, compute_dtype=jnp.float32
    )
    out_f32 = jax.block_until_ready(
        sine_layer_forward_prepared(x, wt32, bp32, n_out)
    )
    ref = jnp.sin(omega_0 * (x @ weight.T + bias))
    assert out_f32.shape == (batch, n_points, out_features)
    assert jnp.allclose(out_f32, ref, atol=5e-4, rtol=5e-4)

    # ---- bf16-MXU path (perf default for v6e/v7x): compare against a
    #      bf16-operand / f32-accumulate reference ----
    wt16, bp16, _ = prepare_sine_layer_params(
        weight, bias, omega_0, compute_dtype=jnp.bfloat16
    )
    out_bf16 = jax.block_until_ready(
        sine_layer_forward_prepared(x, wt16, bp16, n_out)
    )
    x_cast = x.reshape(-1, in_features).astype(jnp.bfloat16).astype(jnp.float32)
    ref_bf16 = jnp.sin(
        x_cast @ wt16[:, :n_out].astype(jnp.float32) + bp16[0, :n_out]
    ).reshape(batch, n_points, out_features)
    assert out_bf16.shape == (batch, n_points, out_features)
    assert jnp.allclose(out_bf16, ref_bf16, atol=2e-2, rtol=2e-2)

    print("KERNEL_OK")
</pallas_src>

<mosaic_0001>
module attributes {stable_mosaic.version = 11 : i64} {
  func.func @_sine_fused_kernel(%arg0: i32, %arg1: i32, %arg2: memref<16x32xf32, #tpu.memory_space<vmem>>, %arg3: memref<32x128xf32, #tpu.memory_space<vmem>>, %arg4: memref<1x128xf32, #tpu.memory_space<vmem>>, %arg5: memref<16x128xf32, #tpu.memory_space<vmem>>) attributes {dimension_semantics = [#tpu.dimension_semantics<parallel>, #tpu.dimension_semantics<parallel>], iteration_bounds = array<i64: 1, 1>, scalar_prefetch = 0 : i64, scratch_operands = 0 : i64, tpu.core_type = #tpu.core_type<tc>, window_params = [{transform_indices = @transform_0, window_bounds = array<i64: 16, 32>}, {transform_indices = @transform_1, window_bounds = array<i64: 32, 128>}, {transform_indices = @transform_2, window_bounds = array<i64: 1, 128>}, {transform_indices = @transform_3, window_bounds = array<i64: 16, 128>}]} {
    %c0 = arith.constant 0 : index
    %c0_0 = arith.constant 0 : index
    %0 = vector.load %arg2[%c0, %c0_0] : memref<16x32xf32, #tpu.memory_space<vmem>>, vector<16x32xf32>
    %c0_1 = arith.constant 0 : index
    %c0_2 = arith.constant 0 : index
    %1 = vector.load %arg3[%c0_1, %c0_2] : memref<32x128xf32, #tpu.memory_space<vmem>>, vector<32x128xf32>
    %cst = arith.constant dense<0.000000e+00> : vector<16x128xf32>
    %2 = tpu.matmul %0, %1, %cst {dimension_numbers = #tpu.dot_dimension_numbers<[1], [0], [0], [1], [0, 0, 1, 1], [], []>} : vector<16x32xf32>, vector<32x128xf32>, vector<16x128xf32> -> vector<16x128xf32>
    %c0_3 = arith.constant 0 : index
    %c0_4 = arith.constant 0 : index
    %3 = vector.load %arg4[%c0_3, %c0_4] : memref<1x128xf32, #tpu.memory_space<vmem>>, vector<1x128xf32>
    %4 = vector.broadcast %3 : vector<1x128xf32> to vector<16x128xf32>
    %5 = arith.addf %2, %4 : vector<16x128xf32>
    %6 = math.sin %5 : vector<16x128xf32>
    %c0_5 = arith.constant 0 : index
    %c0_6 = arith.constant 0 : index
    %7 = vector.load %arg5[%c0_5, %c0_6] : memref<16x128xf32, #tpu.memory_space<vmem>>, vector<16x128xf32>
    tpu.vector_store %arg5[%c0_5, %c0_6], %6 {strides = array<i32>} : memref<16x128xf32, #tpu.memory_space<vmem>>, vector<16x128xf32>,
    return
  }
  func.func @transform_0(%arg0: i32, %arg1: i32) -> (i32, i32) {
    %c0_i32 = arith.constant 0 : i32
    %c0_i32_0 = arith.constant 0 : i32
    return %arg0, %c0_i32 : i32, i32
  }
  func.func @transform_1(%arg0: i32, %arg1: i32) -> (i32, i32) {
    %c0_i32 = arith.constant 0 : i32
    %c0_i32_0 = arith.constant 0 : i32
    return %c0_i32, %arg1 : i32, i32
  }
  func.func @transform_2(%arg0: i32, %arg1: i32) -> (i32, i32) {
    %c0_i32 = arith.constant 0 : i32
    %c0_i32_0 = arith.constant 0 : i32
    return %c0_i32, %arg1 : i32, i32
  }
  func.func @transform_3(%arg0: i32, %arg1: i32) -> (i32, i32) {
    %c0_i32 = arith.constant 0 : i32
    return %arg0, %arg1 : i32, i32
  }
}

</mosaic_0001>

<llo_original>
// kernel: tpu_custom_call.1
$region0: #{tpu_custom_call.1}
  #allocation0 [shape = 'u32[]', space=smem, size = 0x4, offset = 0x4, fixed_abs, tag = 'smem constant byte address 0x4 - core index']
  #allocation1 [shape = 'u32[72,128]{1,0:T(1,128)}', space=vmem, size = 0x9000, scoped, tag = 'internal scratch']
  %s0 = inlined_call_operand.hbm [shape: f32[16,32], index: 0, kind: input, shape index: {}]
  %s1 = inlined_call_operand.hbm [shape: f32[32,128], index: 1, kind: input, shape index: {}]
  %s2 = inlined_call_operand.vmem [shape: f32[1,128], index: 2, kind: input, shape index: {}]
  %s3 = inlined_call_operand.hbm [shape: f32[16,128], index: 3, kind: output, shape index: {}]
  %s4 = sld [smem:[#allocation0]]
  $region30: #{tpu_custom_call.1} parent=0
    _
  %s6 = ssub.s32 1, %s4
  %s7 = scalar_select 0, %s6, %s4
  $region1: #{tpu_custom_call.1} parent=0
    #allocation2 [shape = 'u8[8192]{0}', space=vmem, size = 0x2000, scoped, tag = 'input window, operand 0, single buffered']
    #allocation3 [shape = 's32[1]{0}', space=sflag, size = 0x4, scoped, tag = 'scoped memory for tpu_custom_call.1']
    #allocation4 [shape = 's32[1]{0}', space=sflag, size = 0x4, scoped, tag = 'scoped memory for tpu_custom_call.1']
    #allocation5 [shape = 'u8[16384]{0}', space=vmem, size = 0x4000, scoped, tag = 'input window, operand 1, single buffered']
    #allocation6 [shape = 's32[1]{0}', space=sflag, size = 0x4, scoped, tag = 'scoped memory for tpu_custom_call.1']
    #allocation7 [shape = 'u8[8192]{0}', space=vmem, size = 0x2000, scoped, tag = 'output window, operand 0, single buffered']
    %8 = vsyncpa [#allocation3], 0
    %9 = vsyncpa [#allocation6], 0
    %10 = vsyncpa [#allocation4], 0
    // Predicated region
    $region2: #{tpu_custom_call.1} parent=1 // pred_check
      _
    $region3: #{tpu_custom_call.1} parent=1 // pred_check_branch
      %12 = sbr.rel (0) target = $region5
    $region4: #{tpu_custom_call.1} parent=1 // pred_region
      %14 = vsyncadd [#allocation3], 0
      %s15 = sshll.u32 %s0, 4
      %s16 = int_to_ptr.hbm [resolvable:$true] %s15
      %s17 = sshll.u32 [#allocation2], 4
      %s18 = int_to_ptr.vmem [resolvable:$true] %s17
      %23 = dma.hbm_to_vmem [thread:$0]  %s16, 256, %s18, [#allocation3], 128, 128, 8
    $region5: #{tpu_custom_call.1} parent=1 // pred_fallthru
      _
    // Predicated region
    $region6: #{tpu_custom_call.1} parent=1 // pred_check
      _
    $region7: #{tpu_custom_call.1} parent=1 // pred_check_branch
      %25 = sbr.rel (0) target = $region9
    $region8: #{tpu_custom_call.1} parent=1 // pred_region
      %27 = vsyncadd [#allocation6], 0
      %s28 = sshll.u32 %s1, 4
      %s29 = int_to_ptr.hbm [resolvable:$true] %s28
      %s30 = sshll.u32 [#allocation5], 4
      %s31 = int_to_ptr.vmem [resolvable:$true] %s30
      %36 = dma.hbm_to_vmem [thread:$0]  %s29, 512, %s31, [#allocation6], 128, 128, 8
    $region9: #{tpu_custom_call.1} parent=1 // pred_fallthru
      _
    // Predicated region
    $region10: #{tpu_custom_call.1} parent=1 // pred_check
      _
    $region11: #{tpu_custom_call.1} parent=1 // pred_check_branch
      %38 = sbr.rel (0) target = $region13
    $region12: #{tpu_custom_call.1} parent=1 // pred_region
      _
    $region13: #{tpu_custom_call.1} parent=1 // pred_fallthru
      _
    // Predicated region
    $region14: #{tpu_custom_call.1} parent=1 // pred_check
      _
    $region15: #{tpu_custom_call.1} parent=1 // pred_check_branch
      %40 = sbr.rel (0) target = $region17
    $region16: #{tpu_custom_call.1} parent=1 // pred_region
      %42 = dma.done [#allocation3], 256
    $region17: #{tpu_custom_call.1} parent=1 // pred_fallthru
      _
    // Predicated region
    $region18: #{tpu_custom_call.1} parent=1 // pred_check
      _
    $region19: #{tpu_custom_call.1} parent=1 // pred_check_branch
      %44 = sbr.rel (0) target = $region21
    $region20: #{tpu_custom_call.1} parent=1 // pred_region
      %46 = dma.done [#allocation6], 512
    $region21: #{tpu_custom_call.1} parent=1 // pred_fallthru
      _
    %v47 = vld [vmem:[#allocation2] sm:$0xff]
    %v48 = vld [vmem:[#allocation2 + $0x8] sm:$0xff]
    %v49 = vld [vmem:[#allocation5] sm:$0xff]
    %v50 = vld [vmem:[#allocation5 + $0x8] sm:$0xff]
    %v51 = vld [vmem:[#allocation5 + $0x10] sm:$0xff]
    %v52 = vld [vmem:[#allocation5 + $0x18] sm:$0xff]
    %v53 = vld [vmem:[%s2] sm:$0x1]
    %v55 = vperm.slane %v53, 0
    %vm57 = vcmask 261120
    %v59 = vsel %vm57, %v47, 0
    %v62 = vsel %vm57, %v48, 0
    %64 = vmatpush.msra.mxu0 0.0
    %65 = vmatpush.msra.mxu0 0.0
    %66 = vmatpush.msra.mxu0 0.0
    %67 = vmatpush.msra.mxu0 0.0
    %68 = vmatpush.msra.mxu0 0.0
    %69 = vmatpush.msra.mxu0 0.0
    %70 = vmatpush.msra.mxu0 0.0
    %71 = vmatpush.msra.mxu0 0.0
    %72 = vmatpush.msra.mxu0 0.0
    %73 = vmatpush.msra.mxu0 0.0
    %74 = vmatpush.msra.mxu0 0.0
    %75 = vmatpush.msra.mxu0 0.0
    %76 = vmatpush.msra.mxu0 %v52
    %77 = vmatpush.msra.mxu0 %v51
    %78 = vmatpush.msra.mxu0 %v50
    %79 = vmatpush.msra.mxu0 %v49
    %80 = vmatmul.f32.gmra.mxu0 %v59
    %v81 = vpop.f32.mrf.mxu0
    %v82 = vadd.f32 %v55, %v81
    %83 = vmatmul.f32.gmra.mxu0 %v62
    %v84 = vpop.f32.mrf.mxu0
    %v85 = vadd.f32 %v55, %v84
    %86 = vdwg.mxu0
    %v87 = vand.u32 2147483647, %v82
    %vm88 = vcmp.le.f32.partialorder %v87, 0.7853982
    %vm89 = vcmp.lt.s32.totalorder %v82, 0
    %v90 = vand.u32 %v82, 2139095040
    %v91 = vshrl.u32 %v90, 23
    %v92 = vsub.s32 %v91, 127
    %v93 = vand.u32 2147483647, %v82
    %v94 = vand.u32 %v93, 8388607
    %v95 = vor.u32 %v94, 8388608
    %v96 = vsub.s32 0, %v95
    %v97 = vadd.s32 %v92, 1
    %vm98 = vcmp.gt.s32.totalorder %v97, 0
    %v99 = vsel %vm98, %v97, 0
    %v100 = vshrl.u32 %v99, 5
    %v101 = vand.u32 %v99, 31
    %v102 = vsub.s32 32, %v101
    %v103 = vshrl.u32 683565275, %v102
    %v104 = vshll.u32 683565275, %v101
    %v105 = vshrl.u32 2475754826, %v102
    %v106 = vor.u32 %v104, %v105
    %v107 = vshll.u32 2475754826, %v101
    %v108 = vshrl.u32 2131351028, %v102
    %v109 = vor.u32 %v107, %v108
    %v110 = vshll.u32 2131351028, %v101
    %v111 = vshrl.u32 2102212464, %v102
    %v112 = vor.u32 %v110, %v111
    %v113 = vshll.u32 2102212464, %v101
    %v114 = vshrl.u32 920167782, %v102
    %v115 = vor.u32 %v113, %v114
    %v116 = vshll.u32 920167782, %v101
    %v117 = vshrl.u32 1326507024, %v102
    %v118 = vor.u32 %v116, %v117
    %vm119 = vcmp.lt.s32.totalorder %v100, 1
    %vm120 = vcmp.lt.s32.totalorder %v100, 2
    %vm121 = vcmp.lt.s32.totalorder %v100, 3
    %vm122 = vcmp.lt.s32.totalorder %v100, 4
    %v123 = vsel %vm119, %v103, %v106
    %v124 = vsel %vm122, %v112, 2102212464
    %v125 = vsel %vm121, %v109, %v124
    %v126 = vsel %vm120, %v123, %v125
    %v127 = vsel %vm119, %v106, %v109
    %v128 = vsel %vm122, %v115, 920167782
    %v129 = vsel %vm121, %v112, %v128
    %v130 = vsel %vm120, %v127, %v129
    %v131 = vsel %vm119, %v109, %v112
    %v132 = vsel %vm122, %v118, 1326507024
    %v133 = vsel %vm121, %v115, %v132
    %v134 = vsel %vm120, %v131, %v133
    %v135 = vshll.u32 %v95, 8
    %v136 = vand.u32 %v135, 65535
    %v137 = vshrl.u32 %v135, 16
    %v138 = vand.u32 %v134, 65535
    %v139 = vshrl.u32 %v134, 16
    %v140 = vmul.u32 %v136, %v138
    %v141 = vmul.u32 %v136, %v139
    %v142 = vmul.u32 %v137, %v138
    %v143 = vmul.u32 %v137, %v139
    %v144 = vshll.u32 %v141, 16
    %v145 = vshrl.u32 %v141, 16
    %v146 = vshll.u32 %v142, 16
    %v147 = vshrl.u32 %v142, 16
    %vm148 = vc.u32 %v140, %v144
    %v149 = vsel %vm148, 1, 0
    %v150 = vadd.s32 %v140, %v144
    %v151 = vadd.s32 %v143, %v149
    %vm152 = vc.u32 %v150, %v146
    %v153 = vsel %vm152, 1, 0
    %v154 = vadd.s32 %v150, %v146
    %v155 = vadd.s32 %v151, %v153
    %v156 = vadd.s32 %v155, %v145
    %v157 = vadd.s32 %v156, %v147
    %v158 = vand.u32 %v135, 65535
    %v159 = vshrl.u32 %v135, 16
    %v160 = vand.u32 %v130, 65535
    %v161 = vshrl.u32 %v130, 16
    %v162 = vmul.u32 %v158, %v160
    %v163 = vmul.u32 %v158, %v161
    %v164 = vmul.u32 %v159, %v160
    %v165 = vmul.u32 %v159, %v161
    %v166 = vshll.u32 %v163, 16
    %v167 = vshrl.u32 %v163, 16
    %v168 = vshll.u32 %v164, 16
    %v169 = vshrl.u32 %v164, 16
    %vm170 = vc.u32 %v162, %v166
    %v171 = vsel %vm170, 1, 0
    %v172 = vadd.s32 %v162, %v166
    %v173 = vadd.s32 %v165, %v171
    %vm174 = vc.u32 %v172, %v168
    %v175 = vsel %vm174, 1, 0
    %v176 = vadd.s32 %v172, %v168
    %v177 = vadd.s32 %v173, %v175
    %v178 = vadd.s32 %v177, %v167
    %v179 = vadd.s32 %v178, %v169
    %v180 = vmul.u32 %v135, %v126
    %v181 = vadd.s32 %v157, %v176
    %vm182 = vc.u32 %v157, %v176
    %v183 = vadd.s32 %v179, 1
    %v184 = vsel %vm182, %v183, %v179
    %v185 = vadd.s32 %v180, %v184
    %v186 = vadd.s32 %v185, 536870912
    %v187 = vshrl.u32 %v186, 30
    %v188 = vshll.u32 %v187, 30
    %v189 = vsub.s32 %v185, %v188
    %vm190 = vcmp.lt.s32.totalorder %v189, 0
    %v191 = vsub.s32 0, %v189
    %v192 = vsel %vm190, %v191, %v189
    %v193 = vclz %v192
    %v194 = vsub.s32 %v193, 2
    %vm195 = vcmp.gt.s32.totalorder 0, %v194
    %v196 = vsel %vm195, 0, %v194
    %v197 = vsub.s32 32, %v196
    %v198 = vshll.u32 %v189, %v196
    %v199 = vshrl.u32 %v181, %v197
    %v200 = vor.u32 %v198, %v199
    %v201 = vsub.s32 4294967266, %v196
    %v202 = vadd.s32 %v201, 127
    %v203 = vshll.u32 %v202, 23
    %v204 = vor.u32 4788187, %v203
    %v205 = vand.u32 2147483647, %v204
    %v207 = vcvt.s32.f32 %v200
    %v208 = vmul.f32 %v207, %v205
    %v209 = vxor.u32 %v208, 2147483648
    %v210 = vsel %vm89, %v209, %v208
    %v211 = vsub.s32 4, %v187
    %v212 = vsel %vm89, %v211, %v187
    %v213 = vsel %vm88, %v82, %v210
    %v214 = vsel %vm88, 0, %v212
    %v215 = vmul.f32 %v213, %v213
    %v216 = vmul.f32 %v215, -0.001358992
    %v217 = vadd.f32 %v216, 0.041655596
    %v218 = vmul.f32 %v215, %v217
    %v219 = vadd.f32 %v218, -0.4999988
    %v220 = vmul.f32 %v215, %v219
    %v221 = vadd.f32 1.0, %v220
    %v222 = vmul.f32 %v213, %v213
    %v223 = vmul.f32 %v222, -0.00019511016
    %v224 = vadd.f32 %v223, 0.008332121
    %v225 = vmul.f32 %v222, %v224
    %v226 = vadd.f32 %v225, -0.16666654
    %v227 = vmul.f32 %v222, %v226
    %v228 = vadd.f32 %v227, 1.0
    %v229 = vmul.f32 %v228, %v213
    %vm230 = vweird.f32 %v82
    %v231 = vadd.s32 %v214, 3
    %v232 = vand.u32 %v231, 3
    %vm233 = vcmp.lt.s32.totalorder %v232, 2
    %vm234 = vcmp.eq.s32.totalorder %v232, 0
    %v235 = vxor.u32 %v229, 2147483648
    %v236 = vsel %vm234, %v221, %v235
    %vm237 = vcmp.eq.s32.totalorder %v232, 2
    %v238 = vxor.u32 %v221, 2147483648
    %v239 = vsel %vm237, %v238, %v229
    %v240 = vsel %vm233, %v236, %v239
    %v241 = vsel %vm230, nan, %v240
    %v242 = vand.u32 2147483647, %v85
    %vm243 = vcmp.le.f32.partialorder %v242, 0.7853982
    %vm244 = vcmp.lt.s32.totalorder %v85, 0
    %v245 = vand.u32 %v85, 2139095040
    %v246 = vshrl.u32 %v245, 23
    %v247 = vsub.s32 %v246, 127
    %v248 = vand.u32 2147483647, %v85
    %v249 = vand.u32 %v248, 8388607
    %v250 = vor.u32 %v249, 8388608
    %v251 = vsub.s32 0, %v250
    %v252 = vadd.s32 %v247, 1
    %vm253 = vcmp.gt.s32.totalorder %v252, 0
    %v254 = vsel %vm253, %v252, 0
    %v255 = vshrl.u32 %v254, 5
    %v256 = vand.u32 %v254, 31
    %v257 = vsub.s32 32, %v256
    %v258 = vshrl.u32 683565275, %v257
    %v259 = vshll.u32 683565275, %v256
    %v260 = vshrl.u32 2475754826, %v257
    %v261 = vor.u32 %v259, %v260
    %v262 = vshll.u32 2475754826, %v256
    %v263 = vshrl.u32 2131351028, %v257
    %v264 = vor.u32 %v262, %v263
    %v265 = vshll.u32 2131351028, %v256
    %v266 = vshrl.u32 2102212464, %v257
    %v267 = vor.u32 %v265, %v266
    %v268 = vshll.u32 2102212464, %v256
    %v269 = vshrl.u32 920167782, %v257
    %v270 = vor.u32 %v268, %v269
    %v271 = vshll.u32 920167782, %v256
    %v272 = vshrl.u32 1326507024, %v257
    %v273 = vor.u32 %v271, %v272
    %vm274 = vcmp.lt.s32.totalorder %v255, 1
    %vm275 = vcmp.lt.s32.totalorder %v255, 2
    %vm276 = vcmp.lt.s32.totalorder %v255, 3
    %vm277 = vcmp.lt.s32.totalorder %v255, 4
    %v278 = vsel %vm274, %v258, %v261
    %v279 = vsel %vm277, %v267, 2102212464
    %v280 = vsel %vm276, %v264, %v279
    %v281 = vsel %vm275, %v278, %v280
    %v282 = vsel %vm274, %v261, %v264
    %v283 = vsel %vm277, %v270, 920167782
    %v284 = vsel %vm276, %v267, %v283
    %v285 = vsel %vm275, %v282, %v284
    %v286 = vsel %vm274, %v264, %v267
    %v287 = vsel %vm277, %v273, 1326507024
    %v288 = vsel %vm276, %v270, %v287
    %v289 = vsel %vm275, %v286, %v288
    %v290 = vshll.u32 %v250, 8
    %v291 = vand.u32 %v290, 65535
    %v292 = vshrl.u32 %v290, 16
    %v293 = vand.u32 %v289, 65535
    %v294 = vshrl.u32 %v289, 16
    %v295 = vmul.u32 %v291, %v293
    %v296 = vmul.u32 %v291, %v294
    %v297 = vmul.u32 %v292, %v293
    %v298 = vmul.u32 %v292, %v294
    %v299 = vshll.u32 %v296, 16
    %v300 = vshrl.u32 %v296, 16
    %v301 = vshll.u32 %v297, 16
    %v302 = vshrl.u32 %v297, 16
    %vm303 = vc.u32 %v295, %v299
    %v304 = vsel %vm303, 1, 0
    %v305 = vadd.s32 %v295, %v299
    %v306 = vadd.s32 %v298, %v304
    %vm307 = vc.u32 %v305, %v301
    %v308 = vsel %vm307, 1, 0
    %v309 = vadd.s32 %v305, %v301
    %v310 = vadd.s32 %v306, %v308
    %v311 = vadd.s32 %v310, %v300
    %v312 = vadd.s32 %v311, %v302
    %v313 = vand.u32 %v290, 65535
    %v314 = vshrl.u32 %v290, 16
    %v315 = vand.u32 %v285, 65535
    %v316 = vshrl.u32 %v285, 16
    %v317 = vmul.u32 %v313, %v315
    %v318 = vmul.u32 %v313, %v316
    %v319 = vmul.u32 %v314, %v315
    %v320 = vmul.u32 %v314, %v316
    %v321 = vshll.u32 %v318, 16
    %v322 = vshrl.u32 %v318, 16
    %v323 = vshll.u32 %v319, 16
    %v324 = vshrl.u32 %v319, 16
    %vm325 = vc.u32 %v317, %v321
    %v326 = vsel %vm325, 1, 0
    %v327 = vadd.s32 %v317, %v321
    %v328 = vadd.s32 %v320, %v326
    %vm329 = vc.u32 %v327, %v323
    %v330 = vsel %vm329, 1, 0
    %v331 = vadd.s32 %v327, %v323
    %v332 = vadd.s32 %v328, %v330
    %v333 = vadd.s32 %v332, %v322
    %v334 = vadd.s32 %v333, %v324
    %v335 = vmul.u32 %v290, %v281
    %v336 = vadd.s32 %v312, %v331
    %vm337 = vc.u32 %v312, %v331
    %v338 = vadd.s32 %v334, 1
    %v339 = vsel %vm337, %v338, %v334
    %v340 = vadd.s32 %v335, %v339
    %v341 = vadd.s32 %v340, 536870912
    %v342 = vshrl.u32 %v341, 30
    %v343 = vshll.u32 %v342, 30
    %v344 = vsub.s32 %v340, %v343
    %vm345 = vcmp.lt.s32.totalorder %v344, 0
    %v346 = vsub.s32 0, %v344
    %v347 = vsel %vm345, %v346, %v344
    %v348 = vclz %v347
    %v349 = vsub.s32 %v348, 2
    %vm350 = vcmp.gt.s32.totalorder 0, %v349
    %v351 = vsel %vm350, 0, %v349
    %v352 = vsub.s32 32, %v351
    %v353 = vshll.u32 %v344, %v351
    %v354 = vshrl.u32 %v336, %v352
    %v355 = vor.u32 %v353, %v354
    %v356 = vsub.s32 4294967266, %v351
    %v357 = vadd.s32 %v356, 127
    %v358 = vshll.u32 %v357, 23
    %v359 = vor.u32 4788187, %v358
    %v360 = vand.u32 2147483647, %v359
    %v362 = vcvt.s32.f32 %v355
    %v363 = vmul.f32 %v362, %v360
    %v364 = vxor.u32 %v363, 2147483648
    %v365 = vsel %vm244, %v364, %v363
    %v366 = vsub.s32 4, %v342
    %v367 = vsel %vm244, %v366, %v342
    %v368 = vsel %vm243, %v85, %v365
    %v369 = vsel %vm243, 0, %v367
    %v370 = vmul.f32 %v368, %v368
    %v371 = vmul.f32 %v370, -0.001358992
    %v372 = vadd.f32 %v371, 0.041655596
    %v373 = vmul.f32 %v370, %v372
    %v374 = vadd.f32 %v373, -0.4999988
    %v375 = vmul.f32 %v370, %v374
    %v376 = vadd.f32 1.0, %v375
    %v377 = vmul.f32 %v368, %v368
    %v378 = vmul.f32 %v377, -0.00019511016
    %v379 = vadd.f32 %v378, 0.008332121
    %v380 = vmul.f32 %v377, %v379
    %v381 = vadd.f32 %v380, -0.16666654
    %v382 = vmul.f32 %v377, %v381
    %v383 = vadd.f32 %v382, 1.0
    %v384 = vmul.f32 %v383, %v368
    %vm385 = vweird.f32 %v85
    %v386 = vadd.s32 %v369, 3
    %v387 = vand.u32 %v386, 3
    %vm388 = vcmp.lt.s32.totalorder %v387, 2
    %vm389 = vcmp.eq.s32.totalorder %v387, 0
    %v390 = vxor.u32 %v384, 2147483648
    %v391 = vsel %vm389, %v376, %v390
    %vm392 = vcmp.eq.s32.totalorder %v387, 2
    %v393 = vxor.u32 %v376, 2147483648
    %v394 = vsel %vm392, %v393, %v384
    %v395 = vsel %vm388, %v391, %v394
    %v396 = vsel %vm385, nan, %v395
    %397 = vst [vmem:[#allocation7] sm:$0xff] %v241
    %398 = vst [vmem:[#allocation7 + $0x8] sm:$0xff] %v396
    // Predicated region
    $region22: #{tpu_custom_call.1} parent=1 // pred_check
      _
    $region23: #{tpu_custom_call.1} parent=1 // pred_check_branch
      %400 = sbr.rel (0) target = $region25
    $region24: #{tpu_custom_call.1} parent=1 // pred_region
      %402 = vsyncadd [#allocation4], 0
      %s403 = sshll.u32 [#allocation7], 4
      %s404 = int_to_ptr.vmem [resolvable:$true] %s403
      %s405 = sshll.u32 %s3, 4
      %s406 = int_to_ptr.hbm [resolvable:$true] %s405
      %411 = dma.vmem_to_hbm [thread:$0]  %s404, 256, %s406, [#allocation4], 128, 128, 8
    $region25: #{tpu_custom_call.1} parent=1 // pred_fallthru
      _
    // Predicated region
    $region26: #{tpu_custom_call.1} parent=1 // pred_check
      _
    $region27: #{tpu_custom_call.1} parent=1 // pred_check_branch
      %413 = sbr.rel (0) target = $region29
    $region28: #{tpu_custom_call.1} parent=1 // pred_region
      %415 = dma.done [#allocation4], 256
    $region29: #{tpu_custom_call.1} parent=1 // pred_fallthru
      _
    %416 = vsyncpa [#allocation3], 1
    %417 = vsyncpa [#allocation6], 1
    %418 = vsyncpa [#allocation4], 1

</llo_original>
